<compile_context>
chip_gen: v5e
topology: v5e:2x2
jax: 0.10.0
libtpu: 0.0.40
codegen_flags: <defaults>
</compile_context>

<pallas_src>
import functools

import jax
import jax.numpy as jnp
from jax.experimental import pallas as pl
from jax.experimental.pallas import tpu as pltpu

LANE = 128
FUSED_MAX_NPAD = 1024               # whole-encoder-in-VMEM path up to this size
X_RESIDENT_MAX_BYTES = 8 * 1024 * 1024


def _vmem_limit_bytes():
    """Scoped-VMEM budget derived from the actual chip (v7x: 64 MiB physical)."""
    try:
        cap = getattr(pltpu.get_tpu_info(), "vmem_capacity_bytes", None)
        if cap:
            return min(int(cap) // 2, 64 * 1024 * 1024)
    except Exception:
        pass
    return 32 * 1024 * 1024


# ---------------------------------------------------------------------------
# Kernels
# ---------------------------------------------------------------------------
def _fused_encoder_kernel(a_ref, x_ref, w1_ref, b1_ref, w2_ref, b2_ref, o_ref):
    """Whole 2-layer GCN encoder with everything resident in VMEM (no grid)."""
    a = a_ref[...]
    h = jnp.dot(x_ref[...], w1_ref[...],
                preferred_element_type=jnp.float32).astype(jnp.bfloat16)
    h1 = jnp.dot(a, h, preferred_element_type=jnp.float32) + b1_ref[...]
    h1 = jnp.maximum(h1, 0.0).astype(jnp.bfloat16)
    h2 = jnp.dot(h1, w2_ref[...],
                 preferred_element_type=jnp.float32).astype(jnp.bfloat16)
    out = jnp.dot(a, h2, preferred_element_type=jnp.float32) + b2_ref[...]
    o_ref[...] = out.astype(o_ref.dtype)


def _fused_layer_kernel(a_ref, x_ref, w_ref, b_ref, o_ref, *scratch,
                        apply_relu, nk, tk, x_resident):
    """One GCNConv: O[i] = [relu]( sum_k A[i,k] @ (X[k] @ W) + b ).

    The projection X[k] @ W is fused into the K loop (W resident in VMEM), so
    H never touches HBM.  With nk == 1 the result goes straight to o_ref
    (no f32 scratch accumulator)."""
    k = pl.program_id(1)

    if x_resident:
        x_k = x_ref[pl.ds(pl.multiple_of(k * tk, tk), tk), :]
    else:
        x_k = x_ref[...]
    h_k = jnp.dot(x_k, w_ref[...],
                  preferred_element_type=jnp.float32).astype(jnp.bfloat16)
    contrib = jnp.dot(a_ref[...], h_k, preferred_element_type=jnp.float32)

    if nk == 1:
        out = contrib + b_ref[...]
        if apply_relu:
            out = jnp.maximum(out, 0.0)
        o_ref[...] = out.astype(o_ref.dtype)
        return

    acc_ref = scratch[0]

    @pl.when(k == 0)
    def _():
        acc_ref[...] = jnp.zeros_like(acc_ref)

    acc_ref[...] += contrib

    @pl.when(k == nk - 1)
    def _():
        out = acc_ref[...] + b_ref[...]
        if apply_relu:
            out = jnp.maximum(out, 0.0)
        o_ref[...] = out.astype(o_ref.dtype)


# ---------------------------------------------------------------------------
# pallas_call wrappers
# ---------------------------------------------------------------------------
def _fused_encoder(a_p, x_p, w1_p, b1_p, w2_p, b2_p, *, vmem_limit):
    n_pad = a_p.shape[0]
    f_out_p = w2_p.shape[1]
    vmem_spec = pl.BlockSpec(memory_space=pltpu.MemorySpace.VMEM)
    return pl.pallas_call(
        _fused_encoder_kernel,
        out_shape=jax.ShapeDtypeStruct((n_pad, f_out_p), jnp.float32),
        in_specs=[vmem_spec] * 6,
        out_specs=vmem_spec,
        compiler_params=pltpu.CompilerParams(vmem_limit_bytes=vmem_limit),
    )(a_p, x_p, w1_p, b1_p, w2_p, b2_p)


def _fused_gcn_layer(a, x, w, b, *, tm, tk, apply_relu, out_dtype, vmem_limit):
    n = a.shape[0]
    f_in = x.shape[1]
    f_out = w.shape[1]
    ni = n // tm
    nk = n // tk

    x_resident = x.size * x.dtype.itemsize <= X_RESIDENT_MAX_BYTES
    if x_resident:
        # X DMA'd once, stays resident; only A is streamed.
        x_spec = pl.BlockSpec((n, f_in), lambda i, k: (0, 0))
    else:
        x_spec = pl.BlockSpec((tk, f_in), lambda i, k: (k, 0))

    kernel = functools.partial(
        _fused_layer_kernel,
        apply_relu=apply_relu, nk=nk, tk=tk, x_resident=x_resident)

    scratch = [] if nk == 1 else [pltpu.VMEM((tm, f_out), jnp.float32)]

    return pl.pallas_call(
        kernel,
        out_shape=jax.ShapeDtypeStruct((n, f_out), out_dtype),
        grid_spec=pltpu.PrefetchScalarGridSpec(
            num_scalar_prefetch=0,
            grid=(ni, nk),
            in_specs=[
                pl.BlockSpec((tm, tk), lambda i, k: (i, k)),       # A (streamed)
                x_spec,                                            # X (resident / per-k)
                pl.BlockSpec((f_in, f_out), lambda i, k: (0, 0)),  # W  (resident)
                pl.BlockSpec((1, f_out), lambda i, k: (0, 0)),     # bias (resident)
            ],
            out_specs=pl.BlockSpec((tm, f_out), lambda i, k: (i, 0)),
            scratch_shapes=scratch,
        ),
        compiler_params=pltpu.CompilerParams(
            dimension_semantics=("parallel", "arbitrary"),
            vmem_limit_bytes=vmem_limit,
        ),
    )(a, x, w, b)


# ---------------------------------------------------------------------------
# Glue: graph densification + padding + encoder
# ---------------------------------------------------------------------------
def build_normalized_adjacency(edge_index, num_nodes):
    """Dense GCN-normalized adjacency D^{-1/2}(A+I)D^{-1/2}.

    Follows PyG add_remaining_self_loops: self-loops are only added for nodes
    that do not already have one (no double counting)."""
    src, dst = edge_index[0], edge_index[1]
    adj = jnp.zeros((num_nodes, num_nodes), jnp.float32).at[dst, src].add(1.0)
    diag_idx = jnp.arange(num_nodes)
    diag = adj[diag_idx, diag_idx]
    adj = adj.at[diag_idx, diag_idx].set(jnp.where(diag > 0.0, diag, 1.0))
    deg = adj.sum(axis=1)
    dinv = jnp.where(deg > 0.0, 1.0 / jnp.sqrt(deg), 0.0)
    return dinv[:, None] * adj * dinv[None, :]


def _round_up(x, m):
    return ((x + m - 1) // m) * m


def _pick_row_tile(n_pad):
    # Prefer big row slabs, but keep >= 2 steps on the 'parallel' axis so
    # v7x's 2 TensorCores both get work.
    for t in (2048, 1024, 512, 256, 128):
        if n_pad % t == 0 and n_pad // t >= 2:
            return t
    return n_pad


def _pick_k_tile(n_pad):
    for t in (512, 256, 128):
        if n_pad % t == 0:
            return t
    return n_pad


def _pad2(a, shape):
    return jnp.pad(a, [(0, s - d) for d, s in zip(a.shape, shape)])


def gcn_encoder(x, edge_index, w1, b1, w2, b2, *, force_path=None):
    """relu(A_hat @ (X W1) + b1) -> A_hat @ (H1 W2) + b2 (PyG GCNConv x2)."""
    n, f_in = x.shape
    hid = w1.shape[1]
    f_out = w2.shape[1]

    a_hat = build_normalized_adjacency(edge_index, n)

    n_pad = _round_up(n, LANE)
    f_in_p = _round_up(f_in, LANE)
    hid_p = _round_up(hid, LANE)
    f_out_p = _round_up(f_out, LANE)

    bf16 = jnp.bfloat16
    a_p = _pad2(a_hat, (n_pad, n_pad)).astype(bf16)
    x_p = _pad2(x, (n_pad, f_in_p)).astype(bf16)
    w1_p = _pad2(w1, (f_in_p, hid_p)).astype(bf16)
    w2_p = _pad2(w2, (hid_p, f_out_p)).astype(bf16)
    b1_p = _pad2(b1.reshape(1, -1), (1, hid_p)).astype(jnp.float32)
    b2_p = _pad2(b2.reshape(1, -1), (1, f_out_p)).astype(jnp.float32)

    vmem_limit = _vmem_limit_bytes()

    if force_path is None:
        use_fused = n_pad <= FUSED_MAX_NPAD
    else:
        use_fused = force_path == "fused"

    if use_fused:
        out = _fused_encoder(a_p, x_p, w1_p, b1_p, w2_p, b2_p,
                             vmem_limit=vmem_limit)
    else:
        tm = _pick_row_tile(n_pad)
        tk = _pick_k_tile(n_pad)
        # layer 1: relu(A @ (X W1) + b1)   (projection fused into aggregation)
        h1 = _fused_gcn_layer(a_p, x_p, w1_p, b1_p, tm=tm, tk=tk,
                              apply_relu=True, out_dtype=bf16,
                              vmem_limit=vmem_limit)
        # layer 2: A @ (H1 W2) + b2
        out = _fused_gcn_layer(a_p, h1, w2_p, b2_p, tm=tm, tk=tk,
                               apply_relu=False, out_dtype=jnp.float32,
                               vmem_limit=vmem_limit)
    return out[:n, :f_out]


def glorot(key, shape):
    fan_in, fan_out = shape
    limit = jnp.sqrt(6.0 / (fan_in + fan_out))
    return jax.random.uniform(key, shape, jnp.float32, -limit, limit)


def _reference(x, edge_index, w1, b1, w2, b2):
    """Pure-JAX reference mimicking the kernel's bf16 operand rounding."""
    bf, f32 = jnp.bfloat16, jnp.float32
    n = x.shape[0]
    a = build_normalized_adjacency(edge_index, n).astype(bf).astype(f32)
    xb = x.astype(bf).astype(f32)
    w1b = w1.astype(bf).astype(f32)
    w2b = w2.astype(bf).astype(f32)
    h = (xb @ w1b).astype(bf).astype(f32)
    h1 = jnp.maximum(a @ h + b1, 0.0).astype(bf).astype(f32)
    h2 = (h1 @ w2b).astype(bf).astype(f32)
    return a @ h2 + b2


# ---------------------------------------------------------------------------
if __name__ == "__main__":
    N = 8          # number of graph nodes
    IN_CH = 4      # in_channels
    HID = 16       # hidden_channels
    OUT_CH = 8     # out_channels

    key = jax.random.PRNGKey(0)
    kx, kw1, kw2, kb1, kb2 = jax.random.split(key, 5)

    x = jax.random.normal(kx, (N, IN_CH), jnp.float32)

    # deterministic bidirectional ring graph: edge_index shape (2, 2N)
    s = jnp.arange(N, dtype=jnp.int32)
    d = (s + 1) % N
    edge_index = jnp.stack(
        [jnp.concatenate([s, d]), jnp.concatenate([d, s])], axis=0
    )

    w1 = glorot(kw1, (IN_CH, HID))
    b1 = 0.1 * jax.random.normal(kb1, (1, HID), jnp.float32)
    w2 = glorot(kw2, (HID, OUT_CH))
    b2 = 0.1 * jax.random.normal(kb2, (1, OUT_CH), jnp.float32)

    # --- test 1: toy graph -> fully fused single-call path --------------------
    out = gcn_encoder(x, edge_index, w1, b1, w2, b2)
    jax.block_until_ready(out)
    ref = _reference(x, edge_index, w1, b1, w2, b2)
    assert out.shape == (N, OUT_CH)
    assert jnp.allclose(out, ref, atol=2e-2, rtol=2e-2), (
        "fused-path mismatch vs. reference, max abs err = "
        + str(float(jnp.max(jnp.abs(out - ref))))
    )

    # --- test 2: larger random graph -> tiled fused-layer path ----------------
    N2 = 300
    k2x, k2e = jax.random.split(jax.random.PRNGKey(1), 2)
    x2 = jax.random.normal(k2x, (N2, IN_CH), jnp.float32)
    edge_index2 = jax.random.randint(k2e, (2, 1200), 0, N2, jnp.int32)
    out2 = gcn_encoder(x2, edge_index2, w1, b1, w2, b2, force_path="tiled")
    jax.block_until_ready(out2)
    ref2 = _reference(x2, edge_index2, w1, b1, w2, b2)
    assert out2.shape == (N2, OUT_CH)
    assert jnp.allclose(out2, ref2, atol=2e-2, rtol=2e-2), (
        "tiled-path mismatch vs. reference, max abs err = "
        + str(float(jnp.max(jnp.abs(out2 - ref2))))
    )

    print("KERNEL_OK")
</pallas_src>

<mosaic_0001>
module attributes {stable_mosaic.version = 11 : i64} {
  func.func @_fused_encoder_kernel(%arg0: memref<128x128xbf16, #tpu.memory_space<vmem>>, %arg1: memref<128x128xbf16, #tpu.memory_space<vmem>>, %arg2: memref<128x128xbf16, #tpu.memory_space<vmem>>, %arg3: memref<1x128xf32, #tpu.memory_space<vmem>>, %arg4: memref<128x128xbf16, #tpu.memory_space<vmem>>, %arg5: memref<1x128xf32, #tpu.memory_space<vmem>>, %arg6: memref<128x128xf32, #tpu.memory_space<vmem>>) attributes {dimension_semantics = [], scalar_prefetch = 0 : i64, scratch_operands = 0 : i64, tpu.core_type = #tpu.core_type<tc>} {
    %c0 = arith.constant 0 : index
    %c0_0 = arith.constant 0 : index
    %0 = vector.load %arg0[%c0, %c0_0] : memref<128x128xbf16, #tpu.memory_space<vmem>>, vector<128x128xbf16>
    %c0_1 = arith.constant 0 : index
    %c0_2 = arith.constant 0 : index
    %1 = vector.load %arg1[%c0_1, %c0_2] : memref<128x128xbf16, #tpu.memory_space<vmem>>, vector<128x128xbf16>
    %c0_3 = arith.constant 0 : index
    %c0_4 = arith.constant 0 : index
    %2 = vector.load %arg2[%c0_3, %c0_4] : memref<128x128xbf16, #tpu.memory_space<vmem>>, vector<128x128xbf16>
    %cst = arith.constant dense<0.000000e+00> : vector<128x128xf32>
    %3 = tpu.matmul %1, %2, %cst {dimension_numbers = #tpu.dot_dimension_numbers<[1], [0], [0], [1], [0, 0, 1, 1], [], []>} : vector<128x128xbf16>, vector<128x128xbf16>, vector<128x128xf32> -> vector<128x128xf32>
    %4 = arith.truncf %3 : vector<128x128xf32> to vector<128x128xbf16>
    %cst_5 = arith.constant dense<0.000000e+00> : vector<128x128xf32>
    %5 = tpu.matmul %0, %4, %cst_5 {dimension_numbers = #tpu.dot_dimension_numbers<[1], [0], [0], [1], [0, 0, 1, 1], [], []>} : vector<128x128xbf16>, vector<128x128xbf16>, vector<128x128xf32> -> vector<128x128xf32>
    %c0_6 = arith.constant 0 : index
    %c0_7 = arith.constant 0 : index
    %6 = vector.load %arg3[%c0_6, %c0_7] : memref<1x128xf32, #tpu.memory_space<vmem>>, vector<1x128xf32>
    %7 = vector.broadcast %6 : vector<1x128xf32> to vector<128x128xf32>
    %8 = arith.addf %5, %7 : vector<128x128xf32>
    %cst_8 = arith.constant 0.000000e+00 : f32
    %9 = vector.broadcast %cst_8 : f32 to vector<128x128xf32>
    %10 = arith.maximumf %8, %9 : vector<128x128xf32>
    %11 = arith.truncf %10 : vector<128x128xf32> to vector<128x128xbf16>
    %c0_9 = arith.constant 0 : index
    %c0_10 = arith.constant 0 : index
    %12 = vector.load %arg4[%c0_9, %c0_10] : memref<128x128xbf16, #tpu.memory_space<vmem>>, vector<128x128xbf16>
    %cst_11 = arith.constant dense<0.000000e+00> : vector<128x128xf32>
    %13 = tpu.matmul %11, %12, %cst_11 {dimension_numbers = #tpu.dot_dimension_numbers<[1], [0], [0], [1], [0, 0, 1, 1], [], []>} : vector<128x128xbf16>, vector<128x128xbf16>, vector<128x128xf32> -> vector<128x128xf32>
    %14 = arith.truncf %13 : vector<128x128xf32> to vector<128x128xbf16>
    %cst_12 = arith.constant dense<0.000000e+00> : vector<128x128xf32>
    %15 = tpu.matmul %0, %14, %cst_12 {dimension_numbers = #tpu.dot_dimension_numbers<[1], [0], [0], [1], [0, 0, 1, 1], [], []>} : vector<128x128xbf16>, vector<128x128xbf16>, vector<128x128xf32> -> vector<128x128xf32>
    %c0_13 = arith.constant 0 : index
    %c0_14 = arith.constant 0 : index
    %16 = vector.load %arg5[%c0_13, %c0_14] : memref<1x128xf32, #tpu.memory_space<vmem>>, vector<1x128xf32>
    %17 = vector.broadcast %16 : vector<1x128xf32> to vector<128x128xf32>
    %18 = arith.addf %15, %17 : vector<128x128xf32>
    %c0_15 = arith.constant 0 : index
    %c0_16 = arith.constant 0 : index
    %19 = vector.load %arg6[%c0_15, %c0_16] : memref<128x128xf32, #tpu.memory_space<vmem>>, vector<128x128xf32>
    tpu.vector_store %arg6[%c0_15, %c0_16], %18 {strides = array<i32>} : memref<128x128xf32, #tpu.memory_space<vmem>>, vector<128x128xf32>,
    return
  }
}

</mosaic_0001>

<llo_original>
// kernel: tpu_custom_call.1
$region0: #{tpu_custom_call.1}
  #allocation0 [shape = 'u32[]', space=smem, size = 0x4, offset = 0x4, fixed_abs, tag = 'smem constant byte address 0x4 - core index']
  #allocation1 [shape = 'u32[72,128]{1,0:T(1,128)}', space=vmem, size = 0x9000, scoped, tag = 'internal scratch']
  %s0 = inlined_call_operand.hbm [shape: bf16[128,128], index: 0, kind: input, shape index: {}]
  %s1 = inlined_call_operand.hbm [shape: bf16[128,128], index: 1, kind: input, shape index: {}]
  %s2 = inlined_call_operand.hbm [shape: bf16[128,128], index: 2, kind: input, shape index: {}]
  %s3 = inlined_call_operand.vmem [shape: f32[1,128], index: 3, kind: input, shape index: {}]
  %s4 = inlined_call_operand.hbm [shape: bf16[128,128], index: 4, kind: input, shape index: {}]
  %s5 = inlined_call_operand.vmem [shape: f32[1,128], index: 5, kind: input, shape index: {}]
  %s6 = inlined_call_operand.hbm [shape: f32[128,128], index: 6, kind: output, shape index: {}]
  %s7 = sld [smem:[#allocation0]]
  $region50: #{tpu_custom_call.1} parent=0
    _
  %s9 = ssub.s32 1, %s7
  %s10 = scalar_select 0, %s9, %s7
  $region1: #{tpu_custom_call.1} parent=0
    #allocation2 [shape = 'u8[32768]{0}', space=vmem, size = 0x8000, scoped, tag = 'input window, operand 0, single buffered']
    #allocation3 [shape = 's32[1]{0}', space=sflag, size = 0x4, scoped, tag = 'scoped memory for tpu_custom_call.1']
    #allocation4 [shape = 's32[1]{0}', space=sflag, size = 0x4, scoped, tag = 'scoped memory for tpu_custom_call.1']
    #allocation5 [shape = 'u8[32768]{0}', space=vmem, size = 0x8000, scoped, tag = 'input window, operand 1, single buffered']
    #allocation6 [shape = 's32[1]{0}', space=sflag, size = 0x4, scoped, tag = 'scoped memory for tpu_custom_call.1']
    #allocation7 [shape = 'u8[32768]{0}', space=vmem, size = 0x8000, scoped, tag = 'input window, operand 2, single buffered']
    #allocation8 [shape = 'u8[32768]{0}', space=vmem, size = 0x8000, scoped, tag = 'input window, operand 4, single buffered']
    #allocation9 [shape = 's32[1]{0}', space=sflag, size = 0x4, scoped, tag = 'scoped memory for tpu_custom_call.1']
    #allocation10 [shape = 'u8[65536]{0}', space=vmem, size = 0x10000, scoped, tag = 'output window, operand 0, single buffered']
    %11 = vsyncpa [#allocation3], 0
    %12 = vsyncpa [#allocation6], 0
    %13 = vsyncpa [#allocation9], 0
    %14 = vsyncpa [#allocation4], 0
    // Predicated region
    $region2: #{tpu_custom_call.1} parent=1 // pred_check
      _
    $region3: #{tpu_custom_call.1} parent=1 // pred_check_branch
      %16 = sbr.rel (0) target = $region5
    $region4: #{tpu_custom_call.1} parent=1 // pred_region
      %18 = vsyncadd [#allocation3], 0
      %s19 = sshll.u32 %s0, 4
      %s20 = int_to_ptr.hbm [resolvable:$true] %s19
      %s21 = sshll.u32 [#allocation2], 4
      %s22 = int_to_ptr.vmem [resolvable:$true] %s21
      %27 = dma.hbm_to_vmem [thread:$0]  %s20, 1024, %s22, [#allocation3], 64, 64, 4
    $region5: #{tpu_custom_call.1} parent=1 // pred_fallthru
      _
    // Predicated region
    $region6: #{tpu_custom_call.1} parent=1 // pred_check
      _
    $region7: #{tpu_custom_call.1} parent=1 // pred_check_branch
      %29 = sbr.rel (0) target = $region9
    $region8: #{tpu_custom_call.1} parent=1 // pred_region
      %31 = vsyncadd [#allocation6], 0
      %s32 = sshll.u32 %s1, 4
      %s33 = int_to_ptr.hbm [resolvable:$true] %s32
      %s34 = sshll.u32 [#allocation5], 4
      %s35 = int_to_ptr.vmem [resolvable:$true] %s34
      %40 = dma.hbm_to_vmem [thread:$0]  %s33, 1024, %s35, [#allocation6], 64, 64, 4
    $region9: #{tpu_custom_call.1} parent=1 // pred_fallthru
      _
    // Predicated region
    $region10: #{tpu_custom_call.1} parent=1 // pred_check
      _
    $region11: #{tpu_custom_call.1} parent=1 // pred_check_branch
      %42 = sbr.rel (0) target = $region13
    $region12: #{tpu_custom_call.1} parent=1 // pred_region
      %44 = vsyncadd [#allocation6], 0
      %s45 = sshll.u32 %s2, 4
      %s46 = int_to_ptr.hbm [resolvable:$true] %s45
      %s47 = sshll.u32 [#allocation7], 4
      %s48 = int_to_ptr.vmem [resolvable:$true] %s47
      %53 = dma.hbm_to_vmem [thread:$0]  %s46, 1024, %s48, [#allocation6], 64, 64, 4
    $region13: #{tpu_custom_call.1} parent=1 // pred_fallthru
      _
    // Predicated region
    $region14: #{tpu_custom_call.1} parent=1 // pred_check
      _
    $region15: #{tpu_custom_call.1} parent=1 // pred_check_branch
      %55 = sbr.rel (0) target = $region17
    $region16: #{tpu_custom_call.1} parent=1 // pred_region
      _
    $region17: #{tpu_custom_call.1} parent=1 // pred_fallthru
      _
    // Predicated region
    $region18: #{tpu_custom_call.1} parent=1 // pred_check
      _
    $region19: #{tpu_custom_call.1} parent=1 // pred_check_branch
      %57 = sbr.rel (0) target = $region21
    $region20: #{tpu_custom_call.1} parent=1 // pred_region
      %59 = vsyncadd [#allocation9], 0
      %s60 = sshll.u32 %s4, 4
      %s61 = int_to_ptr.hbm [resolvable:$true] %s60
      %s62 = sshll.u32 [#allocation8], 4
      %s63 = int_to_ptr.vmem [resolvable:$true] %s62
      %68 = dma.hbm_to_vmem [thread:$0]  %s61, 1024, %s63, [#allocation9], 64, 64, 4
    $region21: #{tpu_custom_call.1} parent=1 // pred_fallthru
      _
    // Predicated region
    $region22: #{tpu_custom_call.1} parent=1 // pred_check
      _
    $region23: #{tpu_custom_call.1} parent=1 // pred_check_branch
      %70 = sbr.rel (0) target = $region25
    $region24: #{tpu_custom_call.1} parent=1 // pred_region
      _
    $region25: #{tpu_custom_call.1} parent=1 // pred_fallthru
      _
    // Predicated region
    $region26: #{tpu_custom_call.1} parent=1 // pred_check
      _
    $region27: #{tpu_custom_call.1} parent=1 // pred_check_branch
      %72 = sbr.rel (0) target = $region29
    $region28: #{tpu_custom_call.1} parent=1 // pred_region
      %74 = dma.done [#allocation3], 1024
    $region29: #{tpu_custom_call.1} parent=1 // pred_fallthru
      _
    // Predicated region
    $region30: #{tpu_custom_call.1} parent=1 // pred_check
      _
    $region31: #{tpu_custom_call.1} parent=1 // pred_check_branch
      %76 = sbr.rel (0) target = $region33
    $region32: #{tpu_custom_call.1} parent=1 // pred_region
      %78 = dma.done [#allocation6], 1024
    $region33: #{tpu_custom_call.1} parent=1 // pred_fallthru
      _
    // Predicated region
    $region34: #{tpu_custom_call.1} parent=1 // pred_check
      _
    $region35: #{tpu_custom_call.1} parent=1 // pred_check_branch
      %80 = sbr.rel (0) target = $region37
    $region36: #{tpu_custom_call.1} parent=1 // pred_region
      %82 = dma.done [#allocation6], 1024
    $region37: #{tpu_custom_call.1} parent=1 // pred_fallthru
      _
    // Predicated region
    $region38: #{tpu_custom_call.1} parent=1 // pred_check
      _
    $region39: #{tpu_custom_call.1} parent=1 // pred_check_branch
      %84 = sbr.rel (0) target = $region41
    $region40: #{tpu_custom_call.1} parent=1 // pred_region
      %86 = dma.done [#allocation9], 1024
    $region41: #{tpu_custom_call.1} parent=1 // pred_fallthru
      _
    %v87 = vld [vmem:[#allocation2] sm:$0xf]
    %v88 = vld [vmem:[#allocation2 + $0x4] sm:$0xf]
    %v89 = vld [vmem:[#allocation2 + $0x8] sm:$0xf]
    %v90 = vld [vmem:[#allocation2 + $0xc] sm:$0xf]
    %v91 = vld [vmem:[#allocation2 + $0x10] sm:$0xf]
    %v92 = vld [vmem:[#allocation2 + $0x14] sm:$0xf]
    %v93 = vld [vmem:[#allocation2 + $0x18] sm:$0xf]
    %v94 = vld [vmem:[#allocation2 + $0x1c] sm:$0xf]
    %v95 = vld [vmem:[#allocation2 + $0x20] sm:$0xf]
    %v96 = vld [vmem:[#allocation2 + $0x24] sm:$0xf]
    %v97 = vld [vmem:[#allocation2 + $0x28] sm:$0xf]
    %v98 = vld [vmem:[#allocation2 + $0x2c] sm:$0xf]
    %v99 = vld [vmem:[#allocation2 + $0x30] sm:$0xf]
    %v100 = vld [vmem:[#allocation2 + $0x34] sm:$0xf]
    %v101 = vld [vmem:[#allocation2 + $0x38] sm:$0xf]
    %v102 = vld [vmem:[#allocation2 + $0x3c] sm:$0xf]
    %v103 = vld [vmem:[#allocation5] sm:$0xf]
    %v104 = vld [vmem:[#allocation5 + $0x4] sm:$0xf]
    %v105 = vld [vmem:[#allocation5 + $0x8] sm:$0xf]
    %v106 = vld [vmem:[#allocation5 + $0xc] sm:$0xf]
    %v107 = vld [vmem:[#allocation5 + $0x10] sm:$0xf]
    %v108 = vld [vmem:[#allocation5 + $0x14] sm:$0xf]
    %v109 = vld [vmem:[#allocation5 + $0x18] sm:$0xf]
    %v110 = vld [vmem:[#allocation5 + $0x1c] sm:$0xf]
    %v111 = vld [vmem:[#allocation5 + $0x20] sm:$0xf]
    %v112 = vld [vmem:[#allocation5 + $0x24] sm:$0xf]
    %v113 = vld [vmem:[#allocation5 + $0x28] sm:$0xf]
    %v114 = vld [vmem:[#allocation5 + $0x2c] sm:$0xf]
    %v115 = vld [vmem:[#allocation5 + $0x30] sm:$0xf]
    %v116 = vld [vmem:[#allocation5 + $0x34] sm:$0xf]
    %v117 = vld [vmem:[#allocation5 + $0x38] sm:$0xf]
    %v118 = vld [vmem:[#allocation5 + $0x3c] sm:$0xf]
    %v119 = vld [vmem:[#allocation7] sm:$0xf]
    %v120 = vld [vmem:[#allocation7 + $0x4] sm:$0xf]
    %v121 = vld [vmem:[#allocation7 + $0x8] sm:$0xf]
    %v122 = vld [vmem:[#allocation7 + $0xc] sm:$0xf]
    %v123 = vld [vmem:[#allocation7 + $0x10] sm:$0xf]
    %v124 = vld [vmem:[#allocation7 + $0x14] sm:$0xf]
    %v125 = vld [vmem:[#allocation7 + $0x18] sm:$0xf]
    %v126 = vld [vmem:[#allocation7 + $0x1c] sm:$0xf]
    %v127 = vld [vmem:[#allocation7 + $0x20] sm:$0xf]
    %v128 = vld [vmem:[#allocation7 + $0x24] sm:$0xf]
    %v129 = vld [vmem:[#allocation7 + $0x28] sm:$0xf]
    %v130 = vld [vmem:[#allocation7 + $0x2c] sm:$0xf]
    %v131 = vld [vmem:[#allocation7 + $0x30] sm:$0xf]
    %v132 = vld [vmem:[#allocation7 + $0x34] sm:$0xf]
    %v133 = vld [vmem:[#allocation7 + $0x38] sm:$0xf]
    %v134 = vld [vmem:[#allocation7 + $0x3c] sm:$0xf]
    %v151 = vunpack.c.l.b16 %v103
    %v152 = vunpack.c.l.b16 %v104
    %v153 = vunpack.c.l.b16 %v105
    %v154 = vunpack.c.l.b16 %v106
    %v155 = vunpack.c.l.b16 %v107
    %v156 = vunpack.c.l.b16 %v108
    %v157 = vunpack.c.l.b16 %v109
    %v158 = vunpack.c.l.b16 %v110
    %v159 = vunpack.c.l.b16 %v111
    %v160 = vunpack.c.l.b16 %v112
    %v161 = vunpack.c.l.b16 %v113
    %v162 = vunpack.c.l.b16 %v114
    %v163 = vunpack.c.l.b16 %v115
    %v164 = vunpack.c.l.b16 %v116
    %v165 = vunpack.c.l.b16 %v117
    %v166 = vunpack.c.l.b16 %v118
    %v167 = vpack.c.b16 %v152, %v151
    %v168 = vpack.c.b16 %v154, %v153
    %v169 = vpack.c.b16 %v156, %v155
    %v170 = vpack.c.b16 %v158, %v157
    %v171 = vpack.c.b16 %v160, %v159
    %v172 = vpack.c.b16 %v162, %v161
    %v173 = vpack.c.b16 %v164, %v163
    %v174 = vpack.c.b16 %v166, %v165
    %v199 = vunpack.c.l.b16 %v119
    %v200 = vunpack.c.l.b16 %v120
    %v201 = vunpack.c.l.b16 %v121
    %v202 = vunpack.c.l.b16 %v122
    %v203 = vunpack.c.l.b16 %v123
    %v204 = vunpack.c.l.b16 %v124
    %v205 = vunpack.c.l.b16 %v125
    %v206 = vunpack.c.l.b16 %v126
    %v207 = vunpack.c.l.b16 %v127
    %v208 = vunpack.c.l.b16 %v128
    %v209 = vunpack.c.l.b16 %v129
    %v210 = vunpack.c.l.b16 %v130
    %v211 = vunpack.c.l.b16 %v131
    %v212 = vunpack.c.l.b16 %v132
    %v213 = vunpack.c.l.b16 %v133
    %v214 = vunpack.c.l.b16 %v134
    %v215 = vpack.c.b16 %v200, %v199
    %v216 = vpack.c.b16 %v202, %v201
    %v217 = vpack.c.b16 %v204, %v203
    %v218 = vpack.c.b16 %v206, %v205
    %v219 = vpack.c.b16 %v208, %v207
    %v220 = vpack.c.b16 %v210, %v209
    %v221 = vpack.c.b16 %v212, %v211
    %v222 = vpack.c.b16 %v214, %v213
    %231 = vmatpush.bf16.msra.mxu0 %v222
    %232 = vmatpush.bf16.msra.mxu0 %v221
    %233 = vmatpush.bf16.msra.mxu0 %v220
    %234 = vmatpush.bf16.msra.mxu0 %v219
    %235 = vmatpush.bf16.msra.mxu0 %v218
    %236 = vmatpush.bf16.msra.mxu0 %v217
    %237 = vmatpush.bf16.msra.mxu0 %v216
    %238 = vmatpush.bf16.msra.mxu0 %v215
    %239 = vmatmul.bf16.gmra.mxu0 %v167
    %v240 = vpop.f32.mrf.mxu0
    %v241 = vadd.f32 0.0, %v240
    %v242 = vpop.f32.mrf.mxu0
    %v243 = vadd.f32 0.0, %v242
    %244 = vmatmul.bf16.gmra.mxu0 %v168
    %v245 = vpop.f32.mrf.mxu0
    %v246 = vadd.f32 0.0, %v245
    %v247 = vpop.f32.mrf.mxu0
    %v248 = vadd.f32 0.0, %v247
    %249 = vmatmul.bf16.gmra.mxu0 %v169
    %v250 = vpop.f32.mrf.mxu0
    %v251 = vadd.f32 0.0, %v250
    %v252 = vpop.f32.mrf.mxu0
    %v253 = vadd.f32 0.0, %v252
    %254 = vmatmul.bf16.gmra.mxu0 %v170
    %v255 = vpop.f32.mrf.mxu0
    %v256 = vadd.f32 0.0, %v255
    %v257 = vpop.f32.mrf.mxu0
    %v258 = vadd.f32 0.0, %v257
    %259 = vmatmul.bf16.gmra.mxu0 %v171
    %v260 = vpop.f32.mrf.mxu0
    %v261 = vadd.f32 0.0, %v260
    %v262 = vpop.f32.mrf.mxu0
    %v263 = vadd.f32 0.0, %v262
    %264 = vmatmul.bf16.gmra.mxu0 %v172
    %v265 = vpop.f32.mrf.mxu0
    %v266 = vadd.f32 0.0, %v265
    %v267 = vpop.f32.mrf.mxu0
    %v268 = vadd.f32 0.0, %v267
    %269 = vmatmul.bf16.gmra.mxu0 %v173
    %v270 = vpop.f32.mrf.mxu0
    %v271 = vadd.f32 0.0, %v270
    %v272 = vpop.f32.mrf.mxu0
    %v273 = vadd.f32 0.0, %v272
    %274 = vmatmul.bf16.gmra.mxu0 %v174
    %v275 = vpop.f32.mrf.mxu0
    %v276 = vadd.f32 0.0, %v275
    %v277 = vpop.f32.mrf.mxu0
    %v278 = vadd.f32 0.0, %v277
    %279 = vdwg.mxu0
    %v280 = vpack.c.bf16 %v243, %v241
    %v281 = vpack.c.bf16 %v248, %v246
    %v282 = vpack.c.bf16 %v253, %v251
    %v283 = vpack.c.bf16 %v258, %v256
    %v284 = vpack.c.bf16 %v263, %v261
    %v285 = vpack.c.bf16 %v268, %v266
    %v286 = vpack.c.bf16 %v273, %v271
    %v287 = vpack.c.bf16 %v278, %v276
    %v288 = vld [vmem:[%s3] sm:$0x1]
    %v290 = vperm.slane %v288, 0
    %v308 = vunpack.c.l.b16 %v87
    %v309 = vunpack.c.l.b16 %v88
    %v310 = vunpack.c.l.b16 %v89
    %v311 = vunpack.c.l.b16 %v90
    %v312 = vunpack.c.l.b16 %v91
    %v313 = vunpack.c.l.b16 %v92
    %v314 = vunpack.c.l.b16 %v93
    %v315 = vunpack.c.l.b16 %v94
    %v316 = vunpack.c.l.b16 %v95
    %v317 = vunpack.c.l.b16 %v96
    %v318 = vunpack.c.l.b16 %v97
    %v319 = vunpack.c.l.b16 %v98
    %v320 = vunpack.c.l.b16 %v99
    %v321 = vunpack.c.l.b16 %v100
    %v322 = vunpack.c.l.b16 %v101
    %v323 = vunpack.c.l.b16 %v102
    %v324 = vpack.c.b16 %v309, %v308
    %v325 = vpack.c.b16 %v311, %v310
    %v326 = vpack.c.b16 %v313, %v312
    %v327 = vpack.c.b16 %v315, %v314
    %v328 = vpack.c.b16 %v317, %v316
    %v329 = vpack.c.b16 %v319, %v318
    %v330 = vpack.c.b16 %v321, %v320
    %v331 = vpack.c.b16 %v323, %v322
    %340 = vmatpush.bf16.msra.mxu0 %v287
    %341 = vmatpush.bf16.msra.mxu0 %v286
    %342 = vmatpush.bf16.msra.mxu0 %v285
    %343 = vmatpush.bf16.msra.mxu0 %v284
    %344 = vmatpush.bf16.msra.mxu0 %v283
    %345 = vmatpush.bf16.msra.mxu0 %v282
    %346 = vmatpush.bf16.msra.mxu0 %v281
    %347 = vmatpush.bf16.msra.mxu0 %v280
    %348 = vmatmul.bf16.gmra.mxu0 %v324
    %v349 = vpop.f32.mrf.mxu0
    %v350 = vadd.f32 %v290, %v349
    %v351 = vpop.f32.mrf.mxu0
    %v352 = vadd.f32 %v290, %v351
    %353 = vmatmul.bf16.gmra.mxu0 %v325
    %v354 = vpop.f32.mrf.mxu0
    %v355 = vadd.f32 %v290, %v354
    %v356 = vpop.f32.mrf.mxu0
    %v357 = vadd.f32 %v290, %v356
    %358 = vmatmul.bf16.gmra.mxu0 %v326
    %v359 = vpop.f32.mrf.mxu0
    %v360 = vadd.f32 %v290, %v359
    %v361 = vpop.f32.mrf.mxu0
    %v362 = vadd.f32 %v290, %v361
    %363 = vmatmul.bf16.gmra.mxu0 %v327
    %v364 = vpop.f32.mrf.mxu0
    %v365 = vadd.f32 %v290, %v364
    %v366 = vpop.f32.mrf.mxu0
    %v367 = vadd.f32 %v290, %v366
    %368 = vmatmul.bf16.gmra.mxu0 %v328
    %v369 = vpop.f32.mrf.mxu0
    %v370 = vadd.f32 %v290, %v369
    %v371 = vpop.f32.mrf.mxu0
    %v372 = vadd.f32 %v290, %v371
    %373 = vmatmul.bf16.gmra.mxu0 %v329
    %v374 = vpop.f32.mrf.mxu0
    %v375 = vadd.f32 %v290, %v374
    %v376 = vpop.f32.mrf.mxu0
    %v377 = vadd.f32 %v290, %v376
    %378 = vmatmul.bf16.gmra.mxu0 %v330
    %v379 = vpop.f32.mrf.mxu0
    %v380 = vadd.f32 %v290, %v379
    %v381 = vpop.f32.mrf.mxu0
    %v382 = vadd.f32 %v290, %v381
    %383 = vmatmul.bf16.gmra.mxu0 %v331
    %v384 = vpop.f32.mrf.mxu0
    %v385 = vadd.f32 %v290, %v384
    %v386 = vpop.f32.mrf.mxu0
    %v387 = vadd.f32 %v290, %v386
    %388 = vdwg.mxu0
    %v389 = vmax.f32 %v350, 0.0
    %v390 = vmax.f32 %v352, 0.0
    %v391 = vmax.f32 %v355, 0.0
    %v392 = vmax.f32 %v357, 0.0
    %v393 = vmax.f32 %v360, 0.0
    %v394 = vmax.f32 %v362, 0.0
    %v395 = vmax.f32 %v365, 0.0
    %v396 = vmax.f32 %v367, 0.0
    %v397 = vmax.f32 %v370, 0.0
    %v398 = vmax.f32 %v372, 0.0
    %v399 = vmax.f32 %v375, 0.0
    %v400 = vmax.f32 %v377, 0.0
    %v401 = vmax.f32 %v380, 0.0
    %v402 = vmax.f32 %v382, 0.0
    %v403 = vmax.f32 %v385, 0.0
    %v404 = vmax.f32 %v387, 0.0
    %v405 = vpack.c.bf16 %v390, %v389
    %v406 = vpack.c.bf16 %v392, %v391
    %v407 = vpack.c.bf16 %v394, %v393
    %v408 = vpack.c.bf16 %v396, %v395
    %v409 = vpack.c.bf16 %v398, %v397
    %v410 = vpack.c.bf16 %v400, %v399
    %v411 = vpack.c.bf16 %v402, %v401
    %v412 = vpack.c.bf16 %v404, %v403
    %v413 = vld [vmem:[#allocation8] sm:$0xf]
    %v414 = vld [vmem:[#allocation8 + $0x4] sm:$0xf]
    %v415 = vld [vmem:[#allocation8 + $0x8] sm:$0xf]
    %v416 = vld [vmem:[#allocation8 + $0xc] sm:$0xf]
    %v417 = vld [vmem:[#allocation8 + $0x10] sm:$0xf]
    %v418 = vld [vmem:[#allocation8 + $0x14] sm:$0xf]
    %v419 = vld [vmem:[#allocation8 + $0x18] sm:$0xf]
    %v420 = vld [vmem:[#allocation8 + $0x1c] sm:$0xf]
    %v421 = vld [vmem:[#allocation8 + $0x20] sm:$0xf]
    %v422 = vld [vmem:[#allocation8 + $0x24] sm:$0xf]
    %v423 = vld [vmem:[#allocation8 + $0x28] sm:$0xf]
    %v424 = vld [vmem:[#allocation8 + $0x2c] sm:$0xf]
    %v425 = vld [vmem:[#allocation8 + $0x30] sm:$0xf]
    %v426 = vld [vmem:[#allocation8 + $0x34] sm:$0xf]
    %v427 = vld [vmem:[#allocation8 + $0x38] sm:$0xf]
    %v428 = vld [vmem:[#allocation8 + $0x3c] sm:$0xf]
    %v445 = vunpack.c.l.b16 %v413
    %v446 = vunpack.c.l.b16 %v414
    %v447 = vunpack.c.l.b16 %v415
    %v448 = vunpack.c.l.b16 %v416
    %v449 = vunpack.c.l.b16 %v417
    %v450 = vunpack.c.l.b16 %v418
    %v451 = vunpack.c.l.b16 %v419
    %v452 = vunpack.c.l.b16 %v420
    %v453 = vunpack.c.l.b16 %v421
    %v454 = vunpack.c.l.b16 %v422
    %v455 = vunpack.c.l.b16 %v423
    %v456 = vunpack.c.l.b16 %v424
    %v457 = vunpack.c.l.b16 %v425
    %v458 = vunpack.c.l.b16 %v426
    %v459 = vunpack.c.l.b16 %v427
    %v460 = vunpack.c.l.b16 %v428
    %v461 = vpack.c.b16 %v446, %v445
    %v462 = vpack.c.b16 %v448, %v447
    %v463 = vpack.c.b16 %v450, %v449
    %v464 = vpack.c.b16 %v452, %v451
    %v465 = vpack.c.b16 %v454, %v453
    %v466 = vpack.c.b16 %v456, %v455
    %v467 = vpack.c.b16 %v458, %v457
    %v468 = vpack.c.b16 %v460, %v459
    %477 = vmatpush.bf16.msra.mxu0 %v468
    %478 = vmatpush.bf16.msra.mxu0 %v467
    %479 = vmatpush.bf16.msra.mxu0 %v466
    %480 = vmatpush.bf16.msra.mxu0 %v465
    %481 = vmatpush.bf16.msra.mxu0 %v464
    %482 = vmatpush.bf16.msra.mxu0 %v463
    %483 = vmatpush.bf16.msra.mxu0 %v462
    %484 = vmatpush.bf16.msra.mxu0 %v461
    %485 = vmatmul.bf16.gmra.mxu0 %v405
    %v486 = vpop.f32.mrf.mxu0
    %v487 = vadd.f32 0.0, %v486
    %v488 = vpop.f32.mrf.mxu0
    %v489 = vadd.f32 0.0, %v488
    %490 = vmatmul.bf16.gmra.mxu0 %v406
    %v491 = vpop.f32.mrf.mxu0
    %v492 = vadd.f32 0.0, %v491
    %v493 = vpop.f32.mrf.mxu0
    %v494 = vadd.f32 0.0, %v493
    %495 = vmatmul.bf16.gmra.mxu0 %v407
    %v496 = vpop.f32.mrf.mxu0
    %v497 = vadd.f32 0.0, %v496
    %v498 = vpop.f32.mrf.mxu0
    %v499 = vadd.f32 0.0, %v498
    %500 = vmatmul.bf16.gmra.mxu0 %v408
    %v501 = vpop.f32.mrf.mxu0
    %v502 = vadd.f32 0.0, %v501
    %v503 = vpop.f32.mrf.mxu0
    %v504 = vadd.f32 0.0, %v503
    %505 = vmatmul.bf16.gmra.mxu0 %v409
    %v506 = vpop.f32.mrf.mxu0
    %v507 = vadd.f32 0.0, %v506
    %v508 = vpop.f32.mrf.mxu0
    %v509 = vadd.f32 0.0, %v508
    %510 = vmatmul.bf16.gmra.mxu0 %v410
    %v511 = vpop.f32.mrf.mxu0
    %v512 = vadd.f32 0.0, %v511
    %v513 = vpop.f32.mrf.mxu0
    %v514 = vadd.f32 0.0, %v513
    %515 = vmatmul.bf16.gmra.mxu0 %v411
    %v516 = vpop.f32.mrf.mxu0
    %v517 = vadd.f32 0.0, %v516
    %v518 = vpop.f32.mrf.mxu0
    %v519 = vadd.f32 0.0, %v518
    %520 = vmatmul.bf16.gmra.mxu0 %v412
    %v521 = vpop.f32.mrf.mxu0
    %v522 = vadd.f32 0.0, %v521
    %v523 = vpop.f32.mrf.mxu0
    %v524 = vadd.f32 0.0, %v523
    %525 = vdwg.mxu0
    %v526 = vpack.c.bf16 %v489, %v487
    %v527 = vpack.c.bf16 %v494, %v492
    %v528 = vpack.c.bf16 %v499, %v497
    %v529 = vpack.c.bf16 %v504, %v502
    %v530 = vpack.c.bf16 %v509, %v507
    %v531 = vpack.c.bf16 %v514, %v512
    %v532 = vpack.c.bf16 %v519, %v517
    %v533 = vpack.c.bf16 %v524, %v522
    %v534 = vld [vmem:[%s5] sm:$0x1]
    %v536 = vperm.slane %v534, 0
    %538 = vmatpush.bf16.msra.mxu0 %v533
    %539 = vmatpush.bf16.msra.mxu0 %v532
    %540 = vmatpush.bf16.msra.mxu0 %v531
    %541 = vmatpush.bf16.msra.mxu0 %v530
    %542 = vmatpush.bf16.msra.mxu0 %v529
    %543 = vmatpush.bf16.msra.mxu0 %v528
    %544 = vmatpush.bf16.msra.mxu0 %v527
    %545 = vmatpush.bf16.msra.mxu0 %v526
    %546 = vmatmul.bf16.gmra.mxu0 %v324
    %v547 = vpop.f32.mrf.mxu0
    %v548 = vadd.f32 %v536, %v547
    %v549 = vpop.f32.mrf.mxu0
    %v550 = vadd.f32 %v536, %v549
    %551 = vmatmul.bf16.gmra.mxu0 %v325
    %v552 = vpop.f32.mrf.mxu0
    %v553 = vadd.f32 %v536, %v552
    %v554 = vpop.f32.mrf.mxu0
    %v555 = vadd.f32 %v536, %v554
    %556 = vmatmul.bf16.gmra.mxu0 %v326
    %v557 = vpop.f32.mrf.mxu0
    %v558 = vadd.f32 %v536, %v557
    %v559 = vpop.f32.mrf.mxu0
    %v560 = vadd.f32 %v536, %v559
    %561 = vmatmul.bf16.gmra.mxu0 %v327
    %v562 = vpop.f32.mrf.mxu0
    %v563 = vadd.f32 %v536, %v562
    %v564 = vpop.f32.mrf.mxu0
    %v565 = vadd.f32 %v536, %v564
    %566 = vmatmul.bf16.gmra.mxu0 %v328
    %v567 = vpop.f32.mrf.mxu0
    %v568 = vadd.f32 %v536, %v567
    %v569 = vpop.f32.mrf.mxu0
    %v570 = vadd.f32 %v536, %v569
    %571 = vmatmul.bf16.gmra.mxu0 %v329
    %v572 = vpop.f32.mrf.mxu0
    %v573 = vadd.f32 %v536, %v572
    %v574 = vpop.f32.mrf.mxu0
    %v575 = vadd.f32 %v536, %v574
    %576 = vmatmul.bf16.gmra.mxu0 %v330
    %v577 = vpop.f32.mrf.mxu0
    %v578 = vadd.f32 %v536, %v577
    %v579 = vpop.f32.mrf.mxu0
    %v580 = vadd.f32 %v536, %v579
    %581 = vmatmul.bf16.gmra.mxu0 %v331
    %v582 = vpop.f32.mrf.mxu0
    %v583 = vadd.f32 %v536, %v582
    %v584 = vpop.f32.mrf.mxu0
    %v585 = vadd.f32 %v536, %v584
    %586 = vdwg.mxu0
    %587 = vst [vmem:[#allocation10] sm:$0xff] %v548
    %588 = vst [vmem:[#allocation10 + $0x8] sm:$0xff] %v550
    %589 = vst [vmem:[#allocation10 + $0x10] sm:$0xff] %v553
    %590 = vst [vmem:[#allocation10 + $0x18] sm:$0xff] %v555
    %591 = vst [vmem:[#allocation10 + $0x20] sm:$0xff] %v558
    %592 = vst [vmem:[#allocation10 + $0x28] sm:$0xff] %v560
    %593 = vst [vmem:[#allocation10 + $0x30] sm:$0xff] %v563
    %594 = vst [vmem:[#allocation10 + $0x38] sm:$0xff] %v565
    %595 = vst [vmem:[#allocation10 + $0x40] sm:$0xff] %v568
    %596 = vst [vmem:[#allocation10 + $0x48] sm:$0xff] %v570
    %597 = vst [vmem:[#allocation10 + $0x50] sm:$0xff] %v573
    %598 = vst [vmem:[#allocation10 + $0x58] sm:$0xff] %v575
    %599 = vst [vmem:[#allocation10 + $0x60] sm:$0xff] %v578
    %600 = vst [vmem:[#allocation10 + $0x68] sm:$0xff] %v580
    %601 = vst [vmem:[#allocation10 + $0x70] sm:$0xff] %v583
    %602 = vst [vmem:[#allocation10 + $0x78] sm:$0xff] %v585
    // Predicated region
    $region42: #{tpu_custom_call.1} parent=1 // pred_check
      _
    $region43: #{tpu_custom_call.1} parent=1 // pred_check_branch
      %604 = sbr.rel (0) target = $region45
    $region44: #{tpu_custom_call.1} parent=1 // pred_region
      %606 = vsyncadd [#allocation4], 0
      %s607 = sshll.u32 [#allocation10], 4
      %s608 = int_to_ptr.vmem [resolvable:$true] %s607
      %s609 = sshll.u32 %s6, 4
      %s610 = int_to_ptr.hbm [resolvable:$true] %s609
      %615 = dma.vmem_to_hbm [thread:$0]  %s608, 2048, %s610, [#allocation4], 128, 128, 8
    $region45: #{tpu_custom_call.1} parent=1 // pred_fallthru
      _
    // Predicated region
    $region46: #{tpu_custom_call.1} parent=1 // pred_check
      _
    $region47: #{tpu_custom_call.1} parent=1 // pred_check_branch
      %617 = sbr.rel (0) target = $region49
    $region48: #{tpu_custom_call.1} parent=1 // pred_region
      %619 = dma.done [#allocation4], 2048
    $region49: #{tpu_custom_call.1} parent=1 // pred_fallthru
      _
    %620 = vsyncpa [#allocation3], 1
    %621 = vsyncpa [#allocation6], 1
    %622 = vsyncpa [#allocation9], 1
    %623 = vsyncpa [#allocation4], 1

</llo_original>
